<compile_context>
chip_gen: v6e
topology: v6e:2x2x1
jax: 0.10.0
libtpu: 0.0.40
codegen_flags: <defaults>
</compile_context>

<pallas_src>
import jax
import jax.numpy as jnp
from jax import lax
from jax.experimental import pallas as pl
from jax.experimental.pallas import tpu as pltpu

LN_EPS = 1e-5
_INV_SQRT2 = 0.7071067811865476


# ---------------------------------------------------------------------------
# Kernels
# ---------------------------------------------------------------------------
def _layernorm_f32(x_ref, gamma_ref, beta_ref):
    x = x_ref[...].astype(jnp.float32)                       # (tm, E)
    mean = jnp.mean(x, axis=-1, keepdims=True)
    xc = x - mean
    var = jnp.mean(xc * xc, axis=-1, keepdims=True)
    inv = lax.rsqrt(var + LN_EPS)
    return xc * inv * gamma_ref[...].astype(jnp.float32) + beta_ref[...].astype(jnp.float32)


def _gelu_exact_f32(h):
    # exact erf GELU == nn.GELU() default.
    # TODO(synk): tanh-approx GELU would route through the EUP (cheaper on v6e/v7x when
    # MXU-bound) but deviates from nn.GELU's default numerics, so exact erf is kept.
    return 0.5 * h * (1.0 + lax.erf(h * jnp.float32(_INV_SQRT2)))


def _mlp_block_resident_kernel(x_ref, gamma_ref, beta_ref, w1_ref, b1_ref,
                               w2_ref, b2_ref, o_ref):
    """Weights fully VMEM-resident: one grid axis over row tiles, fused MLP."""
    xn = _layernorm_f32(x_ref, gamma_ref, beta_ref).astype(x_ref.dtype)
    h = jnp.dot(xn, w1_ref[...], preferred_element_type=jnp.float32)
    h = h + b1_ref[...].astype(jnp.float32)
    h = _gelu_exact_f32(h)
    # TODO(synk): nn.Dropout(p=0.1) skipped — identity in eval/inference mode.
    out = jnp.dot(h.astype(w2_ref.dtype), w2_ref[...], preferred_element_type=jnp.float32)
    o_ref[...] = (out + b2_ref[...].astype(jnp.float32)).astype(o_ref.dtype)


def _mlp_block_tiled_kernel(x_ref, gamma_ref, beta_ref, w1_ref, b1_ref,
                            w2_ref, b2_ref, o_ref, xn_ref, acc_ref):
    """Hidden dim tiled on the (last, 'arbitrary') grid axis with f32 accumulation."""
    k = pl.program_id(1)

    # Once per row tile: LayerNorm (f32 math), cache result, zero accumulator.
    @pl.when(k == 0)
    def _():
        xn_ref[...] = _layernorm_f32(x_ref, gamma_ref, beta_ref).astype(xn_ref.dtype)
        acc_ref[...] = jnp.zeros_like(acc_ref)

    # Linear 1 on this H-tile: (tm, E) @ (E, tH) -> f32.
    h = jnp.dot(xn_ref[...], w1_ref[...], preferred_element_type=jnp.float32)
    h = h + b1_ref[...].astype(jnp.float32)
    h = _gelu_exact_f32(h)
    # TODO(synk): nn.Dropout(p=0.1) skipped — identity in eval/inference mode.

    # Linear 2 partial product: (tm, tH) @ (tH, E), accumulate in f32.
    acc_ref[...] += jnp.dot(h.astype(w2_ref.dtype), w2_ref[...],
                            preferred_element_type=jnp.float32)

    # Finalize: add output bias, cast, lane-dense (tm, E) store.
    @pl.when(k == pl.num_programs(1) - 1)
    def _():
        o_ref[...] = (acc_ref[...] + b2_ref[...].astype(jnp.float32)).astype(o_ref.dtype)


# ---------------------------------------------------------------------------
# Planning helpers
# ---------------------------------------------------------------------------
def _round_up(a, b):
    return (a + b - 1) // b * b


def _vmem_capacity_bytes():
    try:
        info_fn = getattr(pltpu, "get_tpu_info", None)
        if info_fn is not None:
            cap = int(info_fn().vmem_capacity_bytes)
            if cap > 0:
                return cap
    except Exception:
        pass
    return 64 << 20  # conservative fallback == v7x physical VMEM per TC


def _vmem_bytes_resident(tm, E, H, x_item, w_item):
    io_blocks = 2 * (2 * tm * E * x_item)              # x in + out tiles, double-buffered
    w_blocks = 2 * (2 * E * H * w_item)                # w1 + w2 (account double-buffered)
    small = 2 * (3 * E + H) * max(x_item, w_item)      # gamma/beta/b1/b2
    interm = tm * E * 4 + tm * H * 4                   # f32 LN result + hidden activation
    return io_blocks + w_blocks + small + interm


def _vmem_bytes_tiled(tm, tH, E, x_item, w_item):
    io_blocks = 2 * (2 * tm * E * x_item)
    w_blocks = 2 * (2 * E * tH * w_item)               # w1/w2 H-tiles, double-buffered
    small = 2 * (3 * E + tH) * max(x_item, w_item)
    scratch = tm * E * x_item + tm * E * 4             # xn cache + f32 accumulator
    interm = tm * tH * 4 + tm * E * 4
    return io_blocks + w_blocks + small + scratch + interm


def _choose_row_tile(M_base, tm_max, row_align):
    """Largest row tile <= tm_max; prefer divisors of M_base so no wrapper-side pad."""
    if M_base <= tm_max:
        return M_base
    best = 0
    t = row_align
    while t <= tm_max:
        if M_base % t == 0:
            best = t
        t += row_align
    if best >= min(256, M_base):
        return best
    return tm_max  # fall back: pad the ragged tail (rare, e.g. prime-ish M)


def _choose_hidden_tile(H, tm, E, x_item, w_item, budget):
    for tH in (4096, 3072, 2048, 1536, 1024, 768, 512, 384, 256, 128):
        if tH <= H and H % tH == 0:
            if _vmem_bytes_tiled(tm, tH, E, x_item, w_item) <= budget:
                return tH
    return 128


# ---------------------------------------------------------------------------
# Public wrapper
# ---------------------------------------------------------------------------
def mlp_block(x, gamma, beta, w1, b1, w2, b2, *, tm_max=1024):
    """x: (B, S, E). Weights: gamma/beta (E,), w1 (E,H), b1 (H,), w2 (H,E), b2 (E,)."""
    B, S, E = x.shape
    H = w1.shape[1]
    M = B * S

    x_item = jnp.dtype(x.dtype).itemsize
    w_item = jnp.dtype(w1.dtype).itemsize
    row_align = 8 if x_item >= 4 else 16
    tm_max = max(row_align, _round_up(tm_max, row_align))

    M_base = _round_up(M, row_align)
    tm = _choose_row_tile(M_base, tm_max, row_align)

    vmem_cap = _vmem_capacity_bytes()
    budget = int(0.70 * vmem_cap)

    use_resident = (_vmem_bytes_resident(tm, E, H, x_item, w_item) <= budget) or (H % 128 != 0)

    # Megacore (v7x): keep >= 2 row tiles on the 'parallel' axis when weights are
    # resident (splitting rows is free there — weights are fetched once regardless).
    if use_resident and (M_base // tm) == 1 and tm % (2 * row_align) == 0:
        tm //= 2

    M_pad = _round_up(M_base, tm)
    x2 = x.reshape(M, E)
    if M_pad != M:
        # Zero rows are LN-safe (var + eps > 0) and are sliced off afterwards.
        x2 = jnp.pad(x2, ((0, M_pad - M), (0, 0)))

    gamma2 = gamma.reshape(1, E)
    beta2 = beta.reshape(1, E)
    b1_2 = b1.reshape(1, H)
    b2_2 = b2.reshape(1, E)

    n_row = M_pad // tm

    if use_resident:
        needed = _vmem_bytes_resident(tm, E, H, x_item, w_item)
        grid = (n_row,)
        in_specs = [
            pl.BlockSpec((tm, E), lambda i: (i, 0)),   # x rows
            pl.BlockSpec((1, E), lambda i: (0, 0)),    # gamma
            pl.BlockSpec((1, E), lambda i: (0, 0)),    # beta
            pl.BlockSpec((E, H), lambda i: (0, 0)),    # w1 (resident, fetched once)
            pl.BlockSpec((1, H), lambda i: (0, 0)),    # b1
            pl.BlockSpec((H, E), lambda i: (0, 0)),    # w2 (resident, fetched once)
            pl.BlockSpec((1, E), lambda i: (0, 0)),    # b2
        ]
        out_specs = pl.BlockSpec((tm, E), lambda i: (i, 0))
        scratch_shapes = []
        kernel = _mlp_block_resident_kernel
        dim_sem = ("parallel",)
        weight_passes = 1
    else:
        tH = _choose_hidden_tile(H, tm, E, x_item, w_item, budget)
        needed = _vmem_bytes_tiled(tm, tH, E, x_item, w_item)
        grid = (n_row, H // tH)
        in_specs = [
            pl.BlockSpec((tm, E), lambda i, k: (i, 0)),   # x rows (resident across k)
            pl.BlockSpec((1, E), lambda i, k: (0, 0)),    # gamma
            pl.BlockSpec((1, E), lambda i, k: (0, 0)),    # beta
            pl.BlockSpec((E, tH), lambda i, k: (0, k)),   # w1 H-tile
            pl.BlockSpec((1, tH), lambda i, k: (0, k)),   # b1 H-tile
            pl.BlockSpec((tH, E), lambda i, k: (k, 0)),   # w2 H-tile
            pl.BlockSpec((1, E), lambda i, k: (0, 0)),    # b2
        ]
        out_specs = pl.BlockSpec((tm, E), lambda i, k: (i, 0))
        scratch_shapes = [
            pltpu.VMEM((tm, E), x.dtype),       # cached LayerNorm output (matmul LHS)
            pltpu.VMEM((tm, E), jnp.float32),   # f32 accumulator for linear 2
        ]
        kernel = _mlp_block_tiled_kernel
        dim_sem = ("parallel", "arbitrary")
        weight_passes = n_row  # weights re-streamed once per row tile

    # Explicit VMEM limit: planned buffers + headroom, capped below physical VMEM.
    vmem_limit = int(min(0.94 * vmem_cap,
                         max(needed * 1.25 + (8 << 20), 32 << 20)))

    cost = pl.CostEstimate(
        flops=4 * M_pad * E * H,                 # two matmuls, 2*M*E*H each
        transcendentals=M_pad * H,               # erf on the (M, H) intermediate
        bytes_accessed=(2 * M_pad * E * x_item
                        + weight_passes * 2 * E * H * w_item
                        + (H + 3 * E) * w_item),
    )

    out = pl.pallas_call(
        kernel,
        out_shape=jax.ShapeDtypeStruct((M_pad, E), x.dtype),
        grid_spec=pltpu.PrefetchScalarGridSpec(
            num_scalar_prefetch=0,
            grid=grid,
            in_specs=in_specs,
            out_specs=out_specs,
            scratch_shapes=scratch_shapes,
        ),
        compiler_params=pltpu.CompilerParams(
            dimension_semantics=dim_sem,
            vmem_limit_bytes=vmem_limit),
        cost_estimate=cost,
    )(x2, gamma2, beta2, w1, b1_2, w2, b2_2)

    return out[:M].reshape(B, S, E)


# ---------------------------------------------------------------------------
# Reference + test
# ---------------------------------------------------------------------------
def _reference(x, gamma, beta, w1, b1, w2, b2):
    xf = x.astype(jnp.float32)
    mean = jnp.mean(xf, axis=-1, keepdims=True)
    var = jnp.mean((xf - mean) ** 2, axis=-1, keepdims=True)
    xn = (xf - mean) * lax.rsqrt(var + LN_EPS) * gamma + beta
    h = xn @ w1 + b1
    h = 0.5 * h * (1.0 + lax.erf(h / jnp.sqrt(jnp.float32(2.0))))
    return h @ w2 + b2


if __name__ == "__main__":
    key = jax.random.PRNGKey(0)
    B, S, E, H = 2, 8, 32, 64   # small embedding_dim / mlp_size for the synthetic test

    k = jax.random.split(key, 7)
    x = jax.random.normal(k[0], (B, S, E), dtype=jnp.float32)
    gamma = jnp.ones((E,), jnp.float32)
    beta = jnp.zeros((E,), jnp.float32)
    w1 = jax.random.normal(k[1], (E, H), dtype=jnp.float32) * 0.05
    b1 = jax.random.normal(k[2], (H,), dtype=jnp.float32) * 0.05
    w2 = jax.random.normal(k[3], (H, E), dtype=jnp.float32) * 0.05
    b2 = jax.random.normal(k[4], (E,), dtype=jnp.float32) * 0.05

    out = mlp_block(x, gamma, beta, w1, b1, w2, b2)
    out = jax.block_until_ready(out)

    ref = _reference(x, gamma, beta, w1, b1, w2, b2)
    assert out.shape == (B, S, E)
    assert jnp.allclose(out, ref, atol=1e-4, rtol=1e-4), "mismatch vs reference"
    print("KERNEL_OK")
</pallas_src>

<mosaic_0001>
module attributes {stable_mosaic.version = 11 : i64} {
  func.func @_mlp_block_resident_kernel(%arg0: i32, %arg1: memref<8x32xf32, #tpu.memory_space<vmem>>, %arg2: memref<1x32xf32, #tpu.memory_space<vmem>>, %arg3: memref<1x32xf32, #tpu.memory_space<vmem>>, %arg4: memref<32x64xf32, #tpu.memory_space<vmem>>, %arg5: memref<1x64xf32, #tpu.memory_space<vmem>>, %arg6: memref<64x32xf32, #tpu.memory_space<vmem>>, %arg7: memref<1x32xf32, #tpu.memory_space<vmem>>, %arg8: memref<8x32xf32, #tpu.memory_space<vmem>>) attributes {dimension_semantics = [#tpu.dimension_semantics<parallel>], iteration_bounds = array<i64: 2>, scalar_prefetch = 0 : i64, scratch_operands = 0 : i64, tpu.core_type = #tpu.core_type<tc>, window_params = [{transform_indices = @transform_0, window_bounds = array<i64: 8, 32>}, {pipeline_mode = #tpu.pipeline_mode<synchronous>, transform_indices = @transform_1, window_bounds = array<i64: 1, 32>}, {pipeline_mode = #tpu.pipeline_mode<synchronous>, transform_indices = @transform_2, window_bounds = array<i64: 1, 32>}, {pipeline_mode = #tpu.pipeline_mode<synchronous>, transform_indices = @transform_3, window_bounds = array<i64: 32, 64>}, {pipeline_mode = #tpu.pipeline_mode<synchronous>, transform_indices = @transform_4, window_bounds = array<i64: 1, 64>}, {pipeline_mode = #tpu.pipeline_mode<synchronous>, transform_indices = @transform_5, window_bounds = array<i64: 64, 32>}, {pipeline_mode = #tpu.pipeline_mode<synchronous>, transform_indices = @transform_6, window_bounds = array<i64: 1, 32>}, {transform_indices = @transform_7, window_bounds = array<i64: 8, 32>}]} {
    %c0 = arith.constant 0 : index
    %c0_0 = arith.constant 0 : index
    %0 = vector.load %arg1[%c0, %c0_0] : memref<8x32xf32, #tpu.memory_space<vmem>>, vector<8x32xf32>
    %cst = arith.constant dense<0.000000e+00> : vector<8xf32>
    %1 = vector.multi_reduction <add>, %0, %cst [1] : vector<8x32xf32> to vector<8xf32>
    %2 = vector.shape_cast %1 : vector<8xf32> to vector<8x1xf32>
    %cst_1 = arith.constant 3.200000e+01 : f32
    %3 = vector.broadcast %cst_1 : f32 to vector<8x1xf32>
    %4 = arith.divf %2, %3 : vector<8x1xf32>
    %5 = vector.broadcast %4 : vector<8x1xf32> to vector<8x32xf32>
    %6 = arith.subf %0, %5 : vector<8x32xf32>
    %7 = arith.mulf %6, %6 : vector<8x32xf32>
    %cst_2 = arith.constant dense<0.000000e+00> : vector<8xf32>
    %8 = vector.multi_reduction <add>, %7, %cst_2 [1] : vector<8x32xf32> to vector<8xf32>
    %9 = vector.shape_cast %8 : vector<8xf32> to vector<8x1xf32>
    %cst_3 = arith.constant 3.200000e+01 : f32
    %10 = vector.broadcast %cst_3 : f32 to vector<8x1xf32>
    %11 = arith.divf %9, %10 : vector<8x1xf32>
    %cst_4 = arith.constant 9.99999974E-6 : f32
    %12 = vector.broadcast %cst_4 : f32 to vector<8x1xf32>
    %13 = arith.addf %11, %12 : vector<8x1xf32>
    %14 = math.rsqrt %13 : vector<8x1xf32>
    %15 = vector.broadcast %14 : vector<8x1xf32> to vector<8x32xf32>
    %16 = arith.mulf %6, %15 : vector<8x32xf32>
    %c0_5 = arith.constant 0 : index
    %c0_6 = arith.constant 0 : index
    %17 = vector.load %arg2[%c0_5, %c0_6] : memref<1x32xf32, #tpu.memory_space<vmem>>, vector<1x32xf32>
    %18 = vector.broadcast %17 : vector<1x32xf32> to vector<8x32xf32>
    %19 = arith.mulf %16, %18 : vector<8x32xf32>
    %c0_7 = arith.constant 0 : index
    %c0_8 = arith.constant 0 : index
    %20 = vector.load %arg3[%c0_7, %c0_8] : memref<1x32xf32, #tpu.memory_space<vmem>>, vector<1x32xf32>
    %21 = vector.broadcast %20 : vector<1x32xf32> to vector<8x32xf32>
    %22 = arith.addf %19, %21 : vector<8x32xf32>
    %c0_9 = arith.constant 0 : index
    %c0_10 = arith.constant 0 : index
    %23 = vector.load %arg4[%c0_9, %c0_10] : memref<32x64xf32, #tpu.memory_space<vmem>>, vector<32x64xf32>
    %cst_11 = arith.constant dense<0.000000e+00> : vector<8x64xf32>
    %24 = tpu.matmul %22, %23, %cst_11 {dimension_numbers = #tpu.dot_dimension_numbers<[1], [0], [0], [1], [0, 0, 1, 1], [], []>} : vector<8x32xf32>, vector<32x64xf32>, vector<8x64xf32> -> vector<8x64xf32>
    %c0_12 = arith.constant 0 : index
    %c0_13 = arith.constant 0 : index
    %25 = vector.load %arg5[%c0_12, %c0_13] : memref<1x64xf32, #tpu.memory_space<vmem>>, vector<1x64xf32>
    %26 = vector.broadcast %25 : vector<1x64xf32> to vector<8x64xf32>
    %27 = arith.addf %24, %26 : vector<8x64xf32>
    %cst_14 = arith.constant 5.000000e-01 : f32
    %28 = vector.broadcast %cst_14 : f32 to vector<8x64xf32>
    %29 = arith.mulf %28, %27 : vector<8x64xf32>
    %cst_15 = arith.constant 0.707106769 : f32
    %30 = vector.broadcast %cst_15 : f32 to vector<8x64xf32>
    %31 = arith.mulf %27, %30 : vector<8x64xf32>
    %32 = math.erf %31 : vector<8x64xf32>
    %cst_16 = arith.constant 1.000000e+00 : f32
    %33 = vector.broadcast %cst_16 : f32 to vector<8x64xf32>
    %34 = arith.addf %33, %32 : vector<8x64xf32>
    %35 = arith.mulf %29, %34 : vector<8x64xf32>
    %c0_17 = arith.constant 0 : index
    %c0_18 = arith.constant 0 : index
    %36 = vector.load %arg6[%c0_17, %c0_18] : memref<64x32xf32, #tpu.memory_space<vmem>>, vector<64x32xf32>
    %cst_19 = arith.constant dense<0.000000e+00> : vector<8x32xf32>
    %37 = tpu.matmul %35, %36, %cst_19 {dimension_numbers = #tpu.dot_dimension_numbers<[1], [0], [0], [1], [0, 0, 1, 1], [], []>} : vector<8x64xf32>, vector<64x32xf32>, vector<8x32xf32> -> vector<8x32xf32>
    %c0_20 = arith.constant 0 : index
    %c0_21 = arith.constant 0 : index
    %38 = vector.load %arg7[%c0_20, %c0_21] : memref<1x32xf32, #tpu.memory_space<vmem>>, vector<1x32xf32>
    %39 = vector.broadcast %38 : vector<1x32xf32> to vector<8x32xf32>
    %40 = arith.addf %37, %39 : vector<8x32xf32>
    %c0_22 = arith.constant 0 : index
    %c0_23 = arith.constant 0 : index
    %41 = vector.load %arg8[%c0_22, %c0_23] : memref<8x32xf32, #tpu.memory_space<vmem>>, vector<8x32xf32>
    tpu.vector_store %arg8[%c0_22, %c0_23], %40 {strides = array<i32>} : memref<8x32xf32, #tpu.memory_space<vmem>>, vector<8x32xf32>,
    return
  }
  func.func @transform_0(%arg0: i32) -> (i32, i32) {
    %c0_i32 = arith.constant 0 : i32
    %c0_i32_0 = arith.constant 0 : i32
    return %arg0, %c0_i32 : i32, i32
  }
  func.func @transform_1(%arg0: i32) -> (i32, i32) {
    %c0_i32 = arith.constant 0 : i32
    %c0_i32_0 = arith.constant 0 : i32
    %c0_i32_1 = arith.constant 0 : i32
    return %c0_i32, %c0_i32_0 : i32, i32
  }
  func.func @transform_2(%arg0: i32) -> (i32, i32) {
    %c0_i32 = arith.constant 0 : i32
    %c0_i32_0 = arith.constant 0 : i32
    %c0_i32_1 = arith.constant 0 : i32
    return %c0_i32, %c0_i32_0 : i32, i32
  }
  func.func @transform_3(%arg0: i32) -> (i32, i32) {
    %c0_i32 = arith.constant 0 : i32
    %c0_i32_0 = arith.constant 0 : i32
    %c0_i32_1 = arith.constant 0 : i32
    return %c0_i32, %c0_i32_0 : i32, i32
  }
  func.func @transform_4(%arg0: i32) -> (i32, i32) {
    %c0_i32 = arith.constant 0 : i32
    %c0_i32_0 = arith.constant 0 : i32
    %c0_i32_1 = arith.constant 0 : i32
    return %c0_i32, %c0_i32_0 : i32, i32
  }
  func.func @transform_5(%arg0: i32) -> (i32, i32) {
    %c0_i32 = arith.constant 0 : i32
    %c0_i32_0 = arith.constant 0 : i32
    %c0_i32_1 = arith.constant 0 : i32
    return %c0_i32, %c0_i32_0 : i32, i32
  }
  func.func @transform_6(%arg0: i32) -> (i32, i32) {
    %c0_i32 = arith.constant 0 : i32
    %c0_i32_0 = arith.constant 0 : i32
    %c0_i32_1 = arith.constant 0 : i32
    return %c0_i32, %c0_i32_0 : i32, i32
  }
  func.func @transform_7(%arg0: i32) -> (i32, i32) {
    %c0_i32 = arith.constant 0 : i32
    %c0_i32_0 = arith.constant 0 : i32
    return %arg0, %c0_i32 : i32, i32
  }
}

</mosaic_0001>

<llo_original>
// kernel: tpu_custom_call.1
$region0: #{tpu_custom_call.1}
  #allocation0 [shape = 'u32[]', space=smem, size = 0x4, offset = 0x4, fixed_abs, tag = 'smem constant byte address 0x4 - core index']
  #allocation1 [shape = 'u32[144,128]{1,0:T(1,128)}', space=vmem, size = 0x12000, scoped, tag = 'internal scratch']
  %s0 = inlined_call_operand.vmem [shape: f32[16,32], index: 0, kind: input, shape index: {}]
  %s1 = inlined_call_operand.vmem [shape: f32[1,32], index: 1, kind: input, shape index: {}]
  %s2 = inlined_call_operand.vmem [shape: f32[1,32], index: 2, kind: input, shape index: {}]
  %s3 = inlined_call_operand.vmem [shape: f32[32,64], index: 3, kind: input, shape index: {}]
  %s4 = inlined_call_operand.vmem [shape: f32[1,64], index: 4, kind: input, shape index: {}]
  %s5 = inlined_call_operand.vmem [shape: f32[64,32], index: 5, kind: input, shape index: {}]
  %s6 = inlined_call_operand.vmem [shape: f32[1,32], index: 6, kind: input, shape index: {}]
  %s7 = inlined_call_operand.hbm [shape: f32[16,32], index: 7, kind: output, shape index: {}]
  %s8 = sld [smem:[#allocation0]]
  $region61: #{tpu_custom_call.1} parent=0
    _
  %s10 = ssub.s32 1, %s8
  %s11 = scalar_select 0, %s10, %s8
  $region1: #{tpu_custom_call.1} parent=0
    #allocation2 [shape = 'u8[8192]{0}', space=vmem, size = 0x2000, scoped, tag = 'output window, operand 0']
    #allocation3 [shape = 's32[2]{0}', space=sflag, size = 0x8, scoped, tag = 'scoped memory for tpu_custom_call.1']
    %12 = vsyncpa [#allocation3], 0
    %s13 = scalar_lea.sflag [#allocation3], 1
    %14 = vsyncpa %s13, 0
    loop: start=0, step=1, limit=4
    $region2: #{tpu_custom_call.1} parent=1 // loop_pre_header
      _
    $region3: #{tpu_custom_call.1} parent=1 // loop_header
      %s16 = sphi 0, %s20
      %p17 = scmp.ge.s32.totalorder %s16, 4
      %s26 = sphi 0, %s28
      %s29 = sphi 0, %s26
      %s30 = sphi 0, %s29
      %s46 = sphi 0, %s30
      %s50 = sphi 0, %s50
      %s52 = sphi 0, %s50
      %s53 = sphi 0, %s52
      %s67 = sphi 0, %s53
      %s71 = sphi 0, %s71
      %s73 = sphi 0, %s71
      %s74 = sphi 0, %s73
      %s88 = sphi 0, %s74
      %s92 = sphi 0, %s92
      %s94 = sphi 0, %s92
      %s95 = sphi 0, %s94
      %s109 = sphi 0, %s95
      %s113 = sphi 0, %s113
      %s115 = sphi 0, %s113
      %s116 = sphi 0, %s115
      %s130 = sphi 0, %s116
      %s134 = sphi 0, %s134
      %s136 = sphi 0, %s134
      %s137 = sphi 0, %s136
      %s151 = sphi 0, %s137
      %s155 = sphi 0, %s155
      %s157 = sphi 0, %s155
      %s158 = sphi 0, %s157
      %s172 = sphi 0, %s158
      %s178 = sphi 0, %s180
      %s181 = sphi 0, %s178
      %s182 = sphi 0, %s181
      %s198 = sphi 0, %s182
    $region4: #{tpu_custom_call.1} parent=1 // loop_header_branch
      %19 = sbr.rel (%p17) target = $region8
    $region5: #{tpu_custom_call.1} parent=1 // loop_body
      %s21 = ssub.s32 %s16, 1
      %s22 = ssub.s32 %s16, 2
      %s23 = sadd.s32 %s16, 1
      %s24 = ssub.s32 %s16, %s23
      %p25 = scmp.eq.s32.totalorder %s24, 0
      %s27 = sadd.s32 %s26, 1
      %s28 = scalar_select %p25, %s26, %s27
      %p31 = pneg %p25
      %p32 = scmp.eq.s32.totalorder %s16, 1
      %p33 = por %p31, %p32
      %p34 = scmp.ne.s32.totalorder %s26, %s29
      %p35 = scmp.eq.s32.totalorder %s16, 0
      %p36 = por %p34, %p35
      %p37 = scmp.ne.s32.totalorder %s26, %s29
      %p38 = scmp.eq.s32.totalorder %s21, 1
      %p39 = por %p37, %p38
      %p40 = scmp.ne.s32.totalorder %s29, %s30
      %p41 = scmp.eq.s32.totalorder %s21, 0
      %p42 = por %p40, %p41
      %p43 = scmp.ne.s32.totalorder %s29, %s30
      %p44 = scmp.eq.s32.totalorder %s22, 1
      %p45 = por %p43, %p44
      %p47 = scmp.ne.s32.totalorder %s30, %s46
      %p48 = scmp.eq.s32.totalorder %s22, 0
      %p49 = por %p47, %p48
      %s51 = sadd.s32 %s50, 1
      %p54 = scmp.eq.s32.totalorder %s16, 1
      %p55 = scmp.ne.s32.totalorder %s50, %s52
      %p56 = scmp.eq.s32.totalorder %s16, 0
      %p57 = por %p55, %p56
      %p58 = scmp.ne.s32.totalorder %s50, %s52
      %p59 = scmp.eq.s32.totalorder %s21, 1
      %p60 = por %p58, %p59
      %p61 = scmp.ne.s32.totalorder %s52, %s53
      %p62 = scmp.eq.s32.totalorder %s21, 0
      %p63 = por %p61, %p62
      %p64 = scmp.ne.s32.totalorder %s52, %s53
      %p65 = scmp.eq.s32.totalorder %s22, 1
      %p66 = por %p64, %p65
      %p68 = scmp.ne.s32.totalorder %s53, %s67
      %p69 = scmp.eq.s32.totalorder %s22, 0
      %p70 = por %p68, %p69
      %s72 = sadd.s32 %s71, 1
      %p75 = scmp.eq.s32.totalorder %s16, 1
      %p76 = scmp.ne.s32.totalorder %s71, %s73
      %p77 = scmp.eq.s32.totalorder %s16, 0
      %p78 = por %p76, %p77
      %p79 = scmp.ne.s32.totalorder %s71, %s73
      %p80 = scmp.eq.s32.totalorder %s21, 1
      %p81 = por %p79, %p80
      %p82 = scmp.ne.s32.totalorder %s73, %s74
      %p83 = scmp.eq.s32.totalorder %s21, 0
      %p84 = por %p82, %p83
      %p85 = scmp.ne.s32.totalorder %s73, %s74
      %p86 = scmp.eq.s32.totalorder %s22, 1
      %p87 = por %p85, %p86
      %p89 = scmp.ne.s32.totalorder %s74, %s88
      %p90 = scmp.eq.s32.totalorder %s22, 0
      %p91 = por %p89, %p90
      %s93 = sadd.s32 %s92, 1
      %p96 = scmp.eq.s32.totalorder %s16, 1
      %p97 = scmp.ne.s32.totalorder %s92, %s94
      %p98 = scmp.eq.s32.totalorder %s16, 0
      %p99 = por %p97, %p98
      %p100 = scmp.ne.s32.totalorder %s92, %s94
      %p101 = scmp.eq.s32.totalorder %s21, 1
      %p102 = por %p100, %p101
      %p103 = scmp.ne.s32.totalorder %s94, %s95
      %p104 = scmp.eq.s32.totalorder %s21, 0
      %p105 = por %p103, %p104
      %p106 = scmp.ne.s32.totalorder %s94, %s95
      %p107 = scmp.eq.s32.totalorder %s22, 1
      %p108 = por %p106, %p107
      %p110 = scmp.ne.s32.totalorder %s95, %s109
      %p111 = scmp.eq.s32.totalorder %s22, 0
      %p112 = por %p110, %p111
      %s114 = sadd.s32 %s113, 1
      %p117 = scmp.eq.s32.totalorder %s16, 1
      %p118 = scmp.ne.s32.totalorder %s113, %s115
      %p119 = scmp.eq.s32.totalorder %s16, 0
      %p120 = por %p118, %p119
      %p121 = scmp.ne.s32.totalorder %s113, %s115
      %p122 = scmp.eq.s32.totalorder %s21, 1
      %p123 = por %p121, %p122
      %p124 = scmp.ne.s32.totalorder %s115, %s116
      %p125 = scmp.eq.s32.totalorder %s21, 0
      %p126 = por %p124, %p125
      %p127 = scmp.ne.s32.totalorder %s115, %s116
      %p128 = scmp.eq.s32.totalorder %s22, 1
      %p129 = por %p127, %p128
      %p131 = scmp.ne.s32.totalorder %s116, %s130
      %p132 = scmp.eq.s32.totalorder %s22, 0
      %p133 = por %p131, %p132
      %s135 = sadd.s32 %s134, 1
      %p138 = scmp.eq.s32.totalorder %s16, 1
      %p139 = scmp.ne.s32.totalorder %s134, %s136
      %p140 = scmp.eq.s32.totalorder %s16, 0
      %p141 = por %p139, %p140
      %p142 = scmp.ne.s32.totalorder %s134, %s136
      %p143 = scmp.eq.s32.totalorder %s21, 1
      %p144 = por %p142, %p143
      %p145 = scmp.ne.s32.totalorder %s136, %s137
      %p146 = scmp.eq.s32.totalorder %s21, 0
      %p147 = por %p145, %p146
      %p148 = scmp.ne.s32.totalorder %s136, %s137
      %p149 = scmp.eq.s32.totalorder %s22, 1
      %p150 = por %p148, %p149
      %p152 = scmp.ne.s32.totalorder %s137, %s151
      %p153 = scmp.eq.s32.totalorder %s22, 0
      %p154 = por %p152, %p153
      %s156 = sadd.s32 %s155, 1
      %p159 = scmp.eq.s32.totalorder %s16, 1
      %p160 = scmp.ne.s32.totalorder %s155, %s157
      %p161 = scmp.eq.s32.totalorder %s16, 0
      %p162 = por %p160, %p161
      %p163 = scmp.ne.s32.totalorder %s155, %s157
      %p164 = scmp.eq.s32.totalorder %s21, 1
      %p165 = por %p163, %p164
      %p166 = scmp.ne.s32.totalorder %s157, %s158
      %p167 = scmp.eq.s32.totalorder %s21, 0
      %p168 = por %p166, %p167
      %p169 = scmp.ne.s32.totalorder %s157, %s158
      %p170 = scmp.eq.s32.totalorder %s22, 1
      %p171 = por %p169, %p170
      %p173 = scmp.ne.s32.totalorder %s158, %s172
      %p174 = scmp.eq.s32.totalorder %s22, 0
      %p175 = por %p173, %p174
      %s176 = ssub.s32 %s16, %s23
      %p177 = scmp.eq.s32.totalorder %s176, 0
      %s179 = sadd.s32 %s178, 1
      %s180 = scalar_select %p177, %s178, %s179
      %p183 = pneg %p177
      %p184 = scmp.eq.s32.totalorder %s16, 1
      %p185 = por %p183, %p184
      %p186 = scmp.ne.s32.totalorder %s178, %s181
      %p187 = scmp.eq.s32.totalorder %s16, 0
      %p188 = por %p186, %p187
      %p189 = scmp.ne.s32.totalorder %s178, %s181
      %p190 = scmp.eq.s32.totalorder %s21, 1
      %p191 = por %p189, %p190
      %p192 = scmp.ne.s32.totalorder %s181, %s182
      %p193 = scmp.eq.s32.totalorder %s21, 0
      %p194 = por %p192, %p193
      %p195 = scmp.ne.s32.totalorder %s181, %s182
      %p196 = scmp.eq.s32.totalorder %s22, 1
      %p197 = por %p195, %p196
      %p199 = scmp.ne.s32.totalorder %s182, %s198
      %p200 = scmp.eq.s32.totalorder %s22, 0
      %p201 = por %p199, %p200
      %p202 = scmp.le.s32.totalorder 1, %s16
      %p203 = scmp.lt.s32.totalorder %s16, 3
      %p204 = pnand %p202, %p203
      %p205 = pneg %p204
      // Predicated region
      $region9: #{tpu_custom_call.1} parent=5 // pred_check
        _
      $region10: #{tpu_custom_call.1} parent=5 // pred_check_branch
        %207 = sbr.rel (%p204) target = $region12
      $region11: #{tpu_custom_call.1} parent=5 // pred_region
        %s208 = ssub.s32 %s16, 1
        // Predicated region
        $region13: #{tpu_custom_call.1} parent=11 // pred_check
          %p209 = pneg %p63
        $region14: #{tpu_custom_call.1} parent=11 // pred_check_branch
          %211 = sbr.rel (%p209) target = $region16
        $region15: #{tpu_custom_call.1} parent=11 // pred_region
          _
        $region16: #{tpu_custom_call.1} parent=11 // pred_fallthru
          _
        // Predicated region
        $region17: #{tpu_custom_call.1} parent=11 // pred_check
          %p212 = pneg %p84
        $region18: #{tpu_custom_call.1} parent=11 // pred_check_branch
          %214 = sbr.rel (%p212) target = $region20
        $region19: #{tpu_custom_call.1} parent=11 // pred_region
          _
        $region20: #{tpu_custom_call.1} parent=11 // pred_fallthru
          _
        // Predicated region
        $region21: #{tpu_custom_call.1} parent=11 // pred_check
          %p215 = pneg %p105
        $region22: #{tpu_custom_call.1} parent=11 // pred_check_branch
          %217 = sbr.rel (%p215) target = $region24
        $region23: #{tpu_custom_call.1} parent=11 // pred_region
          _
        $region24: #{tpu_custom_call.1} parent=11 // pred_fallthru
          _
        // Predicated region
        $region25: #{tpu_custom_call.1} parent=11 // pred_check
          %p218 = pneg %p126
        $region26: #{tpu_custom_call.1} parent=11 // pred_check_branch
          %220 = sbr.rel (%p218) target = $region28
        $region27: #{tpu_custom_call.1} parent=11 // pred_region
          _
        $region28: #{tpu_custom_call.1} parent=11 // pred_fallthru
          _
        // Predicated region
        $region29: #{tpu_custom_call.1} parent=11 // pred_check
          %p221 = pneg %p147
        $region30: #{tpu_custom_call.1} parent=11 // pred_check_branch
          %223 = sbr.rel (%p221) target = $region32
        $region31: #{tpu_custom_call.1} parent=11 // pred_region
          _
        $region32: #{tpu_custom_call.1} parent=11 // pred_fallthru
          _
        // Predicated region
        $region33: #{tpu_custom_call.1} parent=11 // pred_check
          %p224 = pneg %p168
        $region34: #{tpu_custom_call.1} parent=11 // pred_check_branch
          %226 = sbr.rel (%p224) target = $region36
        $region35: #{tpu_custom_call.1} parent=11 // pred_region
          _
        $region36: #{tpu_custom_call.1} parent=11 // pred_fallthru
          _
      $region12: #{tpu_custom_call.1} parent=5 // pred_fallthru
        _
      %p227 = scmp.lt.s32.totalorder %s16, 2
      // Predicated region
      $region37: #{tpu_custom_call.1} parent=5 // pred_check
        %p228 = pneg %p227
      $region38: #{tpu_custom_call.1} parent=5 // pred_check_branch
        %230 = sbr.rel (%p228) target = $region40
      $region39: #{tpu_custom_call.1} parent=5 // pred_region
        // Predicated region
        $region41: #{tpu_custom_call.1} parent=39 // pred_check
          %p231 = pneg %p36
        $region42: #{tpu_custom_call.1} parent=39 // pred_check_branch
          %233 = sbr.rel (%p231) target = $region44
        $region43: #{tpu_custom_call.1} parent=39 // pred_region
          %p234 = scmp.lt.s32.totalorder %s16, 1
          %s235 = scalar_select %p234, %s16, 1
          %s236 = smul.addr %s235, 8
          %s237 = scalar_lea.vmem %s0, %s236
        $region44: #{tpu_custom_call.1} parent=39 // pred_fallthru
          _
      $region40: #{tpu_custom_call.1} parent=5 // pred_fallthru
        _
      %p238 = scmp.le.s32.totalorder 1, %s16
      %p239 = scmp.lt.s32.totalorder %s16, 3
      %p240 = pnand %p238, %p239
      %p241 = pneg %p240
      // Predicated region
      $region45: #{tpu_custom_call.1} parent=5 // pred_check
        _
      $region46: #{tpu_custom_call.1} parent=5 // pred_check_branch
        %243 = sbr.rel (%p240) target = $region48
      $region47: #{tpu_custom_call.1} parent=5 // pred_region
        %s244 = ssub.s32 %s16, 1
        %p245 = scmp.lt.s32.totalorder %s21, 1
        %s246 = scalar_select %p245, %s21, 1
        %s247 = smul.addr %s246, 8
        %s248 = scalar_lea.vmem %s0, %s247
        %p249 = pneg %p42
        %p250 = pneg %p39
        %p251 = pneg %p63
        %p252 = pneg %p60
        %p253 = pneg %p84
        %p254 = pneg %p81
        %p255 = pneg %p105
        %p256 = pneg %p102
        %p257 = pneg %p126
        %p258 = pneg %p123
        %p259 = pneg %p147
        %p260 = pneg %p144
        %p261 = pneg %p168
        %p262 = pneg %p165
        %p263 = pneg %p194
        %p264 = pneg %p191
        %s265 = sand.u32 %s181, 1
        %s266 = scalar_lea.sflag [#allocation3], %s265
        %s267 = sand.u32 %s181, 1
        %s268 = smul.addr %s267, 8
        %s269 = scalar_lea.vmem [#allocation2], %s268
        %p270 = scmp.lt.s32.totalorder %s21, 1
        %s271 = scalar_select %p270, %s21, 1
        %s272 = smul.addr %s271, 8
        %s273 = scalar_lea.vmem %s0, %s272
        %v274 = vld [vmem:[%s273] sm:$0xff]
        %vm275 = vcmask 261120
        %v276 = vsel %vm275, %v274, 0.0
        %277 = vadd.xlane.f32.xlu0 %v276
        %v278 = vpop.xlane.xlu0 %277
        %v279 = vrcp.pop 32.0
        %v280 = vmul.f32 %v278, %v279
        %v281 = vsub.f32 %v274, %v280
        %v282 = vmul.f32 %v281, %v281
        %v283 = vsel %vm275, %v282, 0.0
        %284 = vadd.xlane.f32.xlu0 %v283
        %v285 = vpop.xlane.xlu0 %284
        %v286 = vmul.f32 %v285, %v279
        %v287 = vadd.f32 %v286, 1e-05
        %v288 = vrsqrt.pop %v287
        %v289 = vmul.f32 %v281, %v288
        %v290 = vld [vmem:[%s1] sm:$0x1]
        %v292 = vlaneseq
        %v293 = vshrl.u32 %v292, 7
        %v294 = vsub.s32 0, %v293
        %v295 = vrot.slane %v290, %v294
        %v297 = vmul.f32 %v289, %v295
        %v298 = vld [vmem:[%s2] sm:$0x1]
        %v300 = vlaneseq
        %v301 = vshrl.u32 %v300, 7
        %v302 = vsub.s32 0, %v301
        %v303 = vrot.slane %v298, %v302
        %v305 = vadd.f32 %v297, %v303
        %v306 = vld [vmem:[%s3] sm:$0xff]
        %v307 = vld [vmem:[%s3 + $0x8] sm:$0xff]
        %v308 = vld [vmem:[%s3 + $0x10] sm:$0xff]
        %v309 = vld [vmem:[%s3 + $0x18] sm:$0xff]
        %v310 = vld [vmem:[%s4] sm:$0x1]
        %v312 = vlaneseq
        %v313 = vshrl.u32 %v312, 7
        %v314 = vsub.s32 0, %v313
        %v315 = vrot.slane %v310, %v314
        %v318 = vsel %vm275, %v305, 0
        %320 = vmatprep.subr.mxu0 0.0
        %321 = vmatpush1.msra.mxu0 0.0
        %322 = vmatprep.subr.mxu0 0.0
        %323 = vmatpush1.msra.mxu0 0.0
        %324 = vmatprep.subr.mxu0 0.0
        %325 = vmatpush1.msra.mxu0 0.0
        %326 = vmatprep.subr.mxu0 0.0
        %327 = vmatpush1.msra.mxu0 0.0
        %328 = vmatprep.subr.mxu0 0.0
        %329 = vmatpush1.msra.mxu0 0.0
        %330 = vmatprep.subr.mxu0 0.0
        %331 = vmatpush1.msra.mxu0 0.0
        %332 = vmatprep.subr.mxu0 0.0
        %333 = vmatpush1.msra.mxu0 0.0
        %334 = vmatprep.subr.mxu0 0.0
        %335 = vmatpush1.msra.mxu0 0.0
        %336 = vmatprep.subr.mxu0 0.0
        %337 = vmatpush1.msra.mxu0 0.0
        %338 = vmatprep.subr.mxu0 0.0
        %339 = vmatpush1.msra.mxu0 0.0
        %340 = vmatprep.subr.mxu0 0.0
        %341 = vmatpush1.msra.mxu0 0.0
        %342 = vmatprep.subr.mxu0 0.0
        %343 = vmatpush1.msra.mxu0 0.0
        %344 = vmatprep.subr.mxu0 0.0
        %345 = vmatpush1.msra.mxu0 %v309
        %346 = vmatprep.subr.mxu0 0.0
        %347 = vmatpush1.msra.mxu0 %v308
        %348 = vmatprep.subr.mxu0 0.0
        %349 = vmatpush1.msra.mxu0 %v307
        %350 = vmatprep.subr.mxu0 0.0
        %351 = vmatpush1.msra.mxu0 %v306
        %352 = vmatprep.subr.mxu0 0.0
        %353 = vmatpush2.msra.mxu0 0.0
        %354 = vmatprep.subr.mxu0 0.0
        %355 = vmatpush2.msra.mxu0 0.0
        %356 = vmatprep.subr.mxu0 0.0
        %357 = vmatpush2.msra.mxu0 0.0
        %358 = vmatprep.subr.mxu0 0.0
        %359 = vmatpush2.msra.mxu0 0.0
        %360 = vmatprep.subr.mxu0 0.0
        %361 = vmatpush2.msra.mxu0 0.0
        %362 = vmatprep.subr.mxu0 0.0
        %363 = vmatpush2.msra.mxu0 0.0
        %364 = vmatprep.subr.mxu0 0.0
        %365 = vmatpush2.msra.mxu0 0.0
        %366 = vmatprep.subr.mxu0 0.0
        %367 = vmatpush2.msra.mxu0 0.0
        %368 = vmatprep.subr.mxu0 0.0
        %369 = vmatpush2.msra.mxu0 0.0
        %370 = vmatprep.subr.mxu0 0.0
        %371 = vmatpush2.msra.mxu0 0.0
        %372 = vmatprep.subr.mxu0 0.0
        %373 = vmatpush2.msra.mxu0 0.0
        %374 = vmatprep.subr.mxu0 0.0
        %375 = vmatpush2.msra.mxu0 0.0
        %376 = vmatprep.subr.mxu0 0.0
        %377 = vmatpush2.msra.mxu0 0.0
        %378 = vmatprep.subr.mxu0 0.0
        %379 = vmatpush2.msra.mxu0 0.0
        %380 = vmatprep.subr.mxu0 0.0
        %381 = vmatpush2.msra.mxu0 0.0
        %382 = vmatprep.subr.mxu0 0.0
        %383 = vmatpush2.msra.mxu0 0.0
        %384 = vmatprep.mubr.f32.mxu0 0.0
        %385 = vmatmul.mubr.f32.gmra.mxu0 %v318
        %v386 = vpop.f32.mrf.mxu0
        %v387 = vadd.f32 %v315, %v386
        %v388 = vpop.f32.mrf.mxu0
        %389 = vdwg.mxu0
        %v390 = vmul.f32 %v387, 0.5
        %v391 = vmul.f32 %v387, 0.70710677
        %v392 = verf.f32.pop %v391
        %v393 = vadd.f32 %v392, 1.0
        %v394 = vmul.f32 %v390, %v393
        %v395 = vld [vmem:[%s5] sm:$0xff]
        %v396 = vld [vmem:[%s5 + $0x8] sm:$0xff]
        %v397 = vld [vmem:[%s5 + $0x10] sm:$0xff]
        %v398 = vld [vmem:[%s5 + $0x18] sm:$0xff]
        %v399 = vld [vmem:[%s5 + $0x20] sm:$0xff]
        %v400 = vld [vmem:[%s5 + $0x28] sm:$0xff]
        %v401 = vld [vmem:[%s5 + $0x30] sm:$0xff]
        %v402 = vld [vmem:[%s5 + $0x38] sm:$0xff]
        %v403 = vld [vmem:[%s6] sm:$0x1]
        %v405 = vlaneseq
        %v406 = vshrl.u32 %v405, 7
        %v407 = vsub.s32 0, %v406
        %v408 = vrot.slane %v403, %v407
        %vm410 = vcmask 523264
        %v412 = vsel %vm410, %v394, 0
        %414 = vmatprep.subr.mxu0 0.0
        %415 = vmatpush1.msra.mxu0 0.0
        %416 = vmatprep.subr.mxu0 0.0
        %417 = vmatpush1.msra.mxu0 0.0
        %418 = vmatprep.subr.mxu0 0.0
        %419 = vmatpush1.msra.mxu0 0.0
        %420 = vmatprep.subr.mxu0 0.0
        %421 = vmatpush1.msra.mxu0 0.0
        %422 = vmatprep.subr.mxu0 0.0
        %423 = vmatpush1.msra.mxu0 0.0
        %424 = vmatprep.subr.mxu0 0.0
        %425 = vmatpush1.msra.mxu0 0.0
        %426 = vmatprep.subr.mxu0 0.0
        %427 = vmatpush1.msra.mxu0 0.0
        %428 = vmatprep.subr.mxu0 0.0
        %429 = vmatpush1.msra.mxu0 0.0
        %430 = vmatprep.subr.mxu0 0.0
        %431 = vmatpush1.msra.mxu0 %v402
        %432 = vmatprep.subr.mxu0 0.0
        %433 = vmatpush1.msra.mxu0 %v401
        %434 = vmatprep.subr.mxu0 0.0
        %435 = vmatpush1.msra.mxu0 %v400
        %436 = vmatprep.subr.mxu0 0.0
        %437 = vmatpush1.msra.mxu0 %v399
        %438 = vmatprep.subr.mxu0 0.0
        %439 = vmatpush1.msra.mxu0 %v398
        %440 = vmatprep.subr.mxu0 0.0
        %441 = vmatpush1.msra.mxu0 %v397
        %442 = vmatprep.subr.mxu0 0.0
        %443 = vmatpush1.msra.mxu0 %v396
        %444 = vmatprep.subr.mxu0 0.0
        %445 = vmatpush1.msra.mxu0 %v395
        %446 = vmatprep.subr.mxu0 0.0
        %447 = vmatpush2.msra.mxu0 0.0
        %448 = vmatprep.subr.mxu0 0.0
        %449 = vmatpush2.msra.mxu0 0.0
        %450 = vmatprep.subr.mxu0 0.0
        %451 = vmatpush2.msra.mxu0 0.0
        %452 = vmatprep.subr.mxu0 0.0
        %453 = vmatpush2.msra.mxu0 0.0
        %454 = vmatprep.subr.mxu0 0.0
        %455 = vmatpush2.msra.mxu0 0.0
        %456 = vmatprep.subr.mxu0 0.0
        %457 = vmatpush2.msra.mxu0 0.0
        %458 = vmatprep.subr.mxu0 0.0
        %459 = vmatpush2.msra.mxu0 0.0
        %460 = vmatprep.subr.mxu0 0.0
        %461 = vmatpush2.msra.mxu0 0.0
        %462 = vmatprep.subr.mxu0 0.0
        %463 = vmatpush2.msra.mxu0 0.0
        %464 = vmatprep.subr.mxu0 0.0
        %465 = vmatpush2.msra.mxu0 0.0
        %466 = vmatprep.subr.mxu0 0.0
        %467 = vmatpush2.msra.mxu0 0.0
        %468 = vmatprep.subr.mxu0 0.0
        %469 = vmatpush2.msra.mxu0 0.0
        %470 = vmatprep.subr.mxu0 0.0
        %471 = vmatpush2.msra.mxu0 0.0
        %472 = vmatprep.subr.mxu0 0.0
        %473 = vmatpush2.msra.mxu0 0.0
        %474 = vmatprep.subr.mxu0 0.0
        %475 = vmatpush2.msra.mxu0 0.0
        %476 = vmatprep.subr.mxu0 0.0
        %477 = vmatpush2.msra.mxu0 0.0
        %478 = vmatprep.mubr.f32.mxu0 0.0
        %479 = vmatmul.mubr.f32.gmra.mxu0 %v412
        %v480 = vpop.f32.mrf.mxu0
        %v481 = vadd.f32 %v408, %v480
        %v482 = vpop.f32.mrf.mxu0
        %483 = vdwg.mxu0
        %484 = vst.msk [vmem:[%s269] sm:$0xff] %vm275, %v481
        %s485 = sand.u32 %s181, 1
        %s486 = scalar_lea.sflag [#allocation3], %s485
        %s487 = sand.u32 %s181, 1
        %s488 = smul.addr %s487, 8
        %s489 = scalar_lea.vmem [#allocation2], %s488
        // Predicated region
        $region49: #{tpu_custom_call.1} parent=47 // pred_check
          %p490 = pneg %p191
        $region50: #{tpu_custom_call.1} parent=47 // pred_check_branch
          %492 = sbr.rel (%p490) target = $region52
        $region51: #{tpu_custom_call.1} parent=47 // pred_region
          %s494 = ssub.s32 128, 128
          %495 = vsyncadd %s486, %s494
          %s496 = smul.addr %s21, 128
          %s497 = scalar_lea.hbm %s7, %s496
          %s499 = sshll.u32 %s489, 4
          %s500 = int_to_ptr.vmem [resolvable:$true] %s499
          %502 = dma.vmem_to_hbm [thread:$0]  %s500, 128, %s497, %s486
        $region52: #{tpu_custom_call.1} parent=47 // pred_fallthru
          _
      $region48: #{tpu_custom_call.1} parent=5 // pred_fallthru
        _
      %p503 = scmp.le.s32.totalorder 2, %s16
      // Predicated region
      $region53: #{tpu_custom_call.1} parent=5 // pred_check
        %p504 = pneg %p503
      $region54: #{tpu_custom_call.1} parent=5 // pred_check_branch
        %506 = sbr.rel (%p504) target = $region56
      $region55: #{tpu_custom_call.1} parent=5 // pred_region
        %s507 = ssub.s32 %s16, 2
        // Predicated region
        $region57: #{tpu_custom_call.1} parent=55 // pred_check
          %p508 = pneg %p197
        $region58: #{tpu_custom_call.1} parent=55 // pred_check_branch
          %510 = sbr.rel (%p508) target = $region60
        $region59: #{tpu_custom_call.1} parent=55 // pred_region
          %s511 = sand.u32 %s182, 1
          %s512 = scalar_lea.sflag [#allocation3], %s511
          %s513 = sand.u32 %s182, 1
          %s514 = smul.addr %s513, 8
          %s515 = scalar_lea.vmem [#allocation2], %s514
          %516 = dma.done %s512, 128
        $region60: #{tpu_custom_call.1} parent=55 // pred_fallthru
          _
      $region56: #{tpu_custom_call.1} parent=5 // pred_fallthru
        _
    $region6: #{tpu_custom_call.1} parent=1 // loop_footer
      %s20 = sadd.s32 1, %s16
    $region7: #{tpu_custom_call.1} parent=1 // loop_footer_branch
      %15 = sbr.rel target = $region3
    $region8: #{tpu_custom_call.1} parent=1 // loop_exit
      _
    %517 = vsyncpa [#allocation3], 1
    %s518 = scalar_lea.sflag [#allocation3], 1
    %519 = vsyncpa %s518, 1

</llo_original>
